<compile_context>
chip_gen: v7x
topology: tpu7x:2x2x1
jax: 0.10.0
libtpu: 0.0.40
codegen_flags: <defaults>
</compile_context>

<pallas_src>
import functools

import jax
import jax.numpy as jnp
from jax import lax
from jax.experimental import pallas as pl
from jax.experimental.pallas import tpu as pltpu


_LANES = 512            # lane-dense last dim (multiple of 128)
_MAX_TILE_ROWS = 2048   # 2048x512 f32 tile = 4 MiB; x2 inputs x2 buffers = 16 MiB VMEM
_GROUP_ROWS = 128       # rows per in-kernel chunk -> ~256 KiB f32 temps, never full-tile


def _round_up(x, m):
    return (x + m - 1) // m * m


def _bce_partial(t_ref, d_ref, base_row, r0, rows, lanes, total, needs_mask):
    """BCE over `rows` tile-local rows starting at r0, folded to an (8, lanes) partial."""
    t = t_ref[pl.ds(r0, rows), :].astype(jnp.float32)
    d = d_ref[pl.ds(r0, rows), :].astype(jnp.float32)
    if needs_mask:
        gr = lax.broadcasted_iota(jnp.int32, (rows, lanes), 0) + (base_row + r0)
        gc = lax.broadcasted_iota(jnp.int32, (rows, lanes), 1)
        valid = gr * lanes + gc < total
        # Mask inputs BEFORE the logs: OOB/garbage data could be negative -> NaN.
        d = jnp.where(valid, d, 0.5)
        t = jnp.where(valid, t, 0.0)
    x = d + 1e-10
    # PyTorch binary_cross_entropy clamps each log term at -100.
    log_x = jnp.maximum(jnp.log(x), -100.0)
    log_1mx = jnp.maximum(jnp.log(1.0 - x), -100.0)
    bce = -(t * log_x + (1.0 - t) * log_1mx)
    if needs_mask:
        bce = jnp.where(valid, bce, 0.0)
    # Fold 8-row sublane groups with pure VPU adds -> lane-dense (8, lanes) partial.
    if rows % 8 == 0:
        return bce.reshape(rows // 8, 8, lanes).sum(axis=0)
    # Tiny-input fallback (rows not 8-aligned): full sublane reduce into row 0.
    s = jnp.sum(bce, axis=0, keepdims=True)
    row_id = lax.broadcasted_iota(jnp.int32, (8, lanes), 0)
    return jnp.where(row_id == 0, s, 0.0)


def _vae_bce_kernel(t_ref, d_ref, out_ref, *, group, total, needs_mask):
    tile_rows, lanes = t_ref.shape
    base_row = pl.program_id(0) * tile_rows
    num_groups = tile_rows // group  # static

    if num_groups == 1:
        out_ref[...] = _bce_partial(t_ref, d_ref, base_row, 0, tile_rows, lanes,
                                    total, needs_mask)
    else:
        def body(g, acc):
            r0 = pl.multiple_of(g * group, group)
            return acc + _bce_partial(t_ref, d_ref, base_row, r0, group, lanes,
                                      total, needs_mask)

        out_ref[...] = lax.fori_loop(0, num_groups, body,
                                     jnp.zeros((8, lanes), jnp.float32))


def vae_loss(target_x, decoded_x, z_mean, z_logvar):
    total = int(target_x.size)

    t_flat = target_x.reshape(-1)
    d_flat = decoded_x.reshape(-1)

    # Lane-dense view (rows, 512). Only a non-multiple-of-512 element count needs a
    # tiny wrapper pad so the reshape is legal; everything else is masked in-kernel.
    rem = total % _LANES
    if rem:
        # TODO(synk): a 1-D tail kernel would avoid this copy; negligible for usual VAE shapes.
        t_flat = jnp.pad(t_flat, (0, _LANES - rem))
        d_flat = jnp.pad(d_flat, (0, _LANES - rem))
    n_rows = t_flat.size // _LANES
    t2 = t_flat.reshape(n_rows, _LANES)
    d2 = d_flat.reshape(n_rows, _LANES)

    # Tile sizing: big tiles for HBM roofline, >=2 tiles whenever there is enough
    # work (v7x 2-TC grid sharding), inner 128-row groups so the elementwise chain
    # never materializes a full-tile f32 temp in VMEM.
    if n_rows < 2 * _GROUP_ROWS:
        tile_rows = n_rows          # block row dim == full array dim (tiny inputs)
        group = n_rows
        num_tiles = 1
    else:
        n_tiles_target = max(pl.cdiv(n_rows, _MAX_TILE_ROWS), 2)
        group = _GROUP_ROWS
        tile_rows = _round_up(pl.cdiv(n_rows, n_tiles_target), group)
        num_tiles = pl.cdiv(n_rows, tile_rows)
    # Do any tiles see rows/elements past `total` (ragged last tile or lane pad)?
    needs_mask = (num_tiles * tile_rows * _LANES) != total

    elems = n_rows * _LANES
    cost = pl.CostEstimate(
        flops=int(10 * elems),
        transcendentals=int(2 * elems),
        bytes_accessed=int(elems * (t2.dtype.itemsize + d2.dtype.itemsize)
                           + num_tiles * 8 * _LANES * 4),
    )

    kernel = functools.partial(_vae_bce_kernel, group=group, total=total,
                               needs_mask=needs_mask)

    partials = pl.pallas_call(
        kernel,
        out_shape=jax.ShapeDtypeStruct((num_tiles * 8, _LANES), jnp.float32),
        grid_spec=pltpu.PrefetchScalarGridSpec(
            num_scalar_prefetch=0,
            grid=(num_tiles,),
            in_specs=[
                pl.BlockSpec((tile_rows, _LANES), lambda i: (i, 0)),   # target tile
                pl.BlockSpec((tile_rows, _LANES), lambda i: (i, 0)),   # decoded tile
            ],
            out_specs=pl.BlockSpec((8, _LANES), lambda i: (i, 0)),
        ),
        compiler_params=pltpu.CompilerParams(
            dimension_semantics=("parallel",),    # lets v7x shard tiles over both TCs
            vmem_limit_bytes=32 * 1024 * 1024,    # safe on v5e / v6e / v7x
        ),
        cost_estimate=cost,
    )(t2, d2)

    # KL term: tiny (B, latent) arrays -> plain JAX in the wrapper; XLA fuses it
    # with the partials epilogue reduce (no extra launch worth a kernel).
    zm = z_mean.astype(jnp.float32)
    zl = z_logvar.astype(jnp.float32)
    kl = -0.5 * jnp.sum(1.0 + zl - zm * zm - jnp.exp(zl))

    return jnp.sum(partials) + kl


def vae_loss_ref(target_x, decoded_x, z_mean, z_logvar):
    x = decoded_x.astype(jnp.float32) + 1e-10
    t = target_x.astype(jnp.float32)
    log_x = jnp.maximum(jnp.log(x), -100.0)
    log_1mx = jnp.maximum(jnp.log(1.0 - x), -100.0)
    recon = jnp.sum(-(t * log_x + (1.0 - t) * log_1mx))
    kl = -0.5 * jnp.sum(1.0 + z_logvar - z_mean ** 2 - jnp.exp(z_logvar))
    return recon + kl


if __name__ == "__main__":
    key = jax.random.PRNGKey(0)

    def make_inputs(k, shape, latent):
        k1, k2, k3, k4 = jax.random.split(k, 4)
        target_x = jax.random.uniform(k1, shape, dtype=jnp.float32)
        decoded_x = jax.nn.sigmoid(jax.random.normal(k2, shape, dtype=jnp.float32))
        z_mean = jax.random.normal(k3, (shape[0], latent), dtype=jnp.float32)
        z_logvar = 0.1 * jax.random.normal(k4, (shape[0], latent), dtype=jnp.float32)
        return target_x, decoded_x, z_mean, z_logvar

    cases = [
        ((2, 4, 16, 16), 32),    # module-sized: single tile, no masking needed
        ((2, 3, 15, 17), 32),    # ragged element count: lane pad + in-kernel tail mask
        ((3, 4, 128, 128), 32),  # multi-tile grid + fori_loop groups + masked last tile
    ]
    keys = jax.random.split(key, len(cases))
    for k, (shape, latent) in zip(keys, cases):
        args = make_inputs(k, shape, latent)
        out = jax.block_until_ready(vae_loss(*args))
        ref = jax.block_until_ready(vae_loss_ref(*args))
        assert jnp.allclose(out, ref, rtol=1e-5, atol=1e-3), (shape, out, ref)

    print("KERNEL_OK")
</pallas_src>

<mosaic_0001>
module attributes {stable_mosaic.version = 11 : i64} {
  func.func @_vae_bce_kernel(%arg0: i32, %arg1: memref<4x512xf32, #tpu.memory_space<vmem>>, %arg2: memref<4x512xf32, #tpu.memory_space<vmem>>, %arg3: memref<8x512xf32, #tpu.memory_space<vmem>>) attributes {dimension_semantics = [#tpu.dimension_semantics<parallel>], iteration_bounds = array<i64: 1>, scalar_prefetch = 0 : i64, scratch_operands = 0 : i64, tpu.core_type = #tpu.core_type<tc>, window_params = [{transform_indices = @transform_0, window_bounds = array<i64: 4, 512>}, {transform_indices = @transform_1, window_bounds = array<i64: 4, 512>}, {transform_indices = @transform_2, window_bounds = array<i64: 8, 512>}]} {
    %c0 = arith.constant 0 : index
    %c0_0 = arith.constant 0 : index
    %0 = vector.load %arg1[%c0, %c0_0] : memref<4x512xf32, #tpu.memory_space<vmem>>, vector<4x512xf32>
    %c0_1 = arith.constant 0 : index
    %c0_2 = arith.constant 0 : index
    %1 = vector.load %arg2[%c0_1, %c0_2] : memref<4x512xf32, #tpu.memory_space<vmem>>, vector<4x512xf32>
    %cst = arith.constant 1.000000e-10 : f32
    %2 = vector.broadcast %cst : f32 to vector<4x512xf32>
    %3 = arith.addf %1, %2 : vector<4x512xf32>
    %4 = math.log %3 : vector<4x512xf32>
    %cst_3 = arith.constant -1.000000e+02 : f32
    %5 = vector.broadcast %cst_3 : f32 to vector<4x512xf32>
    %6 = arith.maximumf %4, %5 : vector<4x512xf32>
    %cst_4 = arith.constant 1.000000e+00 : f32
    %7 = vector.broadcast %cst_4 : f32 to vector<4x512xf32>
    %8 = arith.subf %7, %3 : vector<4x512xf32>
    %9 = math.log %8 : vector<4x512xf32>
    %cst_5 = arith.constant -1.000000e+02 : f32
    %10 = vector.broadcast %cst_5 : f32 to vector<4x512xf32>
    %11 = arith.maximumf %9, %10 : vector<4x512xf32>
    %12 = arith.mulf %0, %6 : vector<4x512xf32>
    %cst_6 = arith.constant 1.000000e+00 : f32
    %13 = vector.broadcast %cst_6 : f32 to vector<4x512xf32>
    %14 = arith.subf %13, %0 : vector<4x512xf32>
    %15 = arith.mulf %14, %11 : vector<4x512xf32>
    %16 = arith.addf %12, %15 : vector<4x512xf32>
    %cst_7 = arith.constant 0.000000e+00 : f32
    %17 = vector.broadcast %cst_7 : f32 to vector<4x512xf32>
    %18 = arith.subf %17, %16 : vector<4x512xf32>
    %cst_8 = arith.constant dense<0.000000e+00> : vector<512xf32>
    %19 = vector.multi_reduction <add>, %18, %cst_8 [0] : vector<4x512xf32> to vector<512xf32>
    %20 = vector.shape_cast %19 : vector<512xf32> to vector<1x512xf32>
    %21 = tpu.iota {dimensions = array<i32: 0>} : vector<8x512xi32>
    %c0_i32 = arith.constant 0 : i32
    %22 = vector.broadcast %c0_i32 : i32 to vector<8x512xi32>
    %23 = arith.cmpi eq, %21, %22 : vector<8x512xi32>
    %cst_9 = arith.constant 0.000000e+00 : f32
    %24 = vector.shape_cast %20 : vector<1x512xf32> to vector<1x512xf32>
    %25 = vector.broadcast %24 : vector<1x512xf32> to vector<8x512xf32>
    %26 = vector.broadcast %cst_9 : f32 to vector<8x512xf32>
    %27 = arith.select %23, %25, %26 : vector<8x512xi1>, vector<8x512xf32>
    %c0_10 = arith.constant 0 : index
    %c0_11 = arith.constant 0 : index
    %28 = vector.load %arg3[%c0_10, %c0_11] : memref<8x512xf32, #tpu.memory_space<vmem>>, vector<8x512xf32>
    tpu.vector_store %arg3[%c0_10, %c0_11], %27 {strides = array<i32>} : memref<8x512xf32, #tpu.memory_space<vmem>>, vector<8x512xf32>,
    return
  }
  func.func @transform_0(%arg0: i32) -> (i32, i32) {
    %c0_i32 = arith.constant 0 : i32
    %c0_i32_0 = arith.constant 0 : i32
    return %arg0, %c0_i32 : i32, i32
  }
  func.func @transform_1(%arg0: i32) -> (i32, i32) {
    %c0_i32 = arith.constant 0 : i32
    %c0_i32_0 = arith.constant 0 : i32
    return %arg0, %c0_i32 : i32, i32
  }
  func.func @transform_2(%arg0: i32) -> (i32, i32) {
    %c0_i32 = arith.constant 0 : i32
    %c0_i32_0 = arith.constant 0 : i32
    return %arg0, %c0_i32 : i32, i32
  }
}

</mosaic_0001>

<llo_original>
// kernel: tpu_custom_call.1
$region0: #{tpu_custom_call.1}
  #allocation0 [shape = 'u32[]', space=smem, size = 0x4, offset = 0x4, fixed_abs, tag = 'smem constant byte address 0x4 - core index']
  #allocation1 [shape = 'u32[144,128]{1,0:T(1,128)}', space=vmem, size = 0x12000, scoped, tag = 'internal scratch']
  %s0 = inlined_call_operand.hbm [shape: f32[4,512], index: 0, kind: input, shape index: {}]
  %s1 = inlined_call_operand.hbm [shape: f32[4,512], index: 1, kind: input, shape index: {}]
  %s2 = inlined_call_operand.hbm [shape: f32[8,512], index: 2, kind: output, shape index: {}]
  %s3 = sld [smem:[#allocation0]]
  $region26: #{tpu_custom_call.1} parent=0
    _
  %s5 = ssub.s32 1, %s3
  %s6 = scalar_select 0, %s5, %s3
  $region1: #{tpu_custom_call.1} parent=0
    #allocation2 [shape = 'u8[8192]{0}', space=vmem, size = 0x2000, scoped, tag = 'input window, operand 0, single buffered']
    #allocation3 [shape = 's32[1]{0}', space=sflag, size = 0x4, scoped, tag = 'scoped memory for tpu_custom_call.1']
    #allocation4 [shape = 's32[1]{0}', space=sflag, size = 0x4, scoped, tag = 'scoped memory for tpu_custom_call.1']
    #allocation5 [shape = 'u8[8192]{0}', space=vmem, size = 0x2000, scoped, tag = 'input window, operand 1, single buffered']
    #allocation6 [shape = 's32[1]{0}', space=sflag, size = 0x4, scoped, tag = 'scoped memory for tpu_custom_call.1']
    #allocation7 [shape = 'u8[16384]{0}', space=vmem, size = 0x4000, scoped, tag = 'output window, operand 0, single buffered']
    %7 = vsyncpa [#allocation3], 0
    %8 = vsyncpa [#allocation6], 0
    %9 = vsyncpa [#allocation4], 0
    // Predicated region
    $region2: #{tpu_custom_call.1} parent=1 // pred_check
      _
    $region3: #{tpu_custom_call.1} parent=1 // pred_check_branch
      %11 = sbr.rel (0) target = $region5
    $region4: #{tpu_custom_call.1} parent=1 // pred_region
      %s13 = ssub.s32 256, 256
      %14 = vsyncadd [#allocation3], %s13
      %s16 = sshll.u32 [#allocation2], 4
      %s17 = int_to_ptr.vmem [resolvable:$true] %s16
      %19 = dma.hbm_to_vmem [thread:$0]  %s0, 256, %s17, [#allocation3]
    $region5: #{tpu_custom_call.1} parent=1 // pred_fallthru
      _
    // Predicated region
    $region6: #{tpu_custom_call.1} parent=1 // pred_check
      _
    $region7: #{tpu_custom_call.1} parent=1 // pred_check_branch
      %21 = sbr.rel (0) target = $region9
    $region8: #{tpu_custom_call.1} parent=1 // pred_region
      %s23 = ssub.s32 256, 256
      %24 = vsyncadd [#allocation6], %s23
      %s26 = sshll.u32 [#allocation5], 4
      %s27 = int_to_ptr.vmem [resolvable:$true] %s26
      %29 = dma.hbm_to_vmem [thread:$0]  %s1, 256, %s27, [#allocation6]
    $region9: #{tpu_custom_call.1} parent=1 // pred_fallthru
      _
    // Predicated region
    $region10: #{tpu_custom_call.1} parent=1 // pred_check
      _
    $region11: #{tpu_custom_call.1} parent=1 // pred_check_branch
      %31 = sbr.rel (0) target = $region13
    $region12: #{tpu_custom_call.1} parent=1 // pred_region
      %32 = dma.done [#allocation3], 256
    $region13: #{tpu_custom_call.1} parent=1 // pred_fallthru
      _
    // Predicated region
    $region14: #{tpu_custom_call.1} parent=1 // pred_check
      _
    $region15: #{tpu_custom_call.1} parent=1 // pred_check_branch
      %34 = sbr.rel (0) target = $region17
    $region16: #{tpu_custom_call.1} parent=1 // pred_region
      %35 = dma.done [#allocation6], 256
    $region17: #{tpu_custom_call.1} parent=1 // pred_fallthru
      _
    %v36 = vld [vmem:[#allocation2] sm:$0xff]
    %v37 = vld [vmem:[#allocation2 + $0x8] sm:$0xff]
    %v38 = vld [vmem:[#allocation5] sm:$0xff]
    %v39 = vld [vmem:[#allocation5 + $0x8] sm:$0xff]
    %v40 = vadd.f32 %v38, 1e-10
    %v41 = vadd.f32 %v39, 1e-10
    %v42 = vlog2.pop %v40
    %v43 = vmul.f32 %v42, 0.6931472
    %v44 = vlog2.pop %v41
    %v45 = vmul.f32 %v44, 0.6931472
    %v46 = vmax.f32 %v43, -100.0
    %v47 = vmax.f32 %v45, -100.0
    %v48 = vsub.f32 1.0, %v40
    %v49 = vsub.f32 1.0, %v41
    %v50 = vlog2.pop %v48
    %v51 = vmul.f32 %v50, 0.6931472
    %v52 = vlog2.pop %v49
    %v53 = vmul.f32 %v52, 0.6931472
    %v54 = vmax.f32 %v51, -100.0
    %v55 = vmax.f32 %v53, -100.0
    %v56 = vmul.f32 %v36, %v46
    %v57 = vmul.f32 %v37, %v47
    %v58 = vsub.f32 1.0, %v36
    %v59 = vsub.f32 1.0, %v37
    %v60 = vmul.f32 %v58, %v54
    %v61 = vmul.f32 %v59, %v55
    %v62 = vadd.f32 %v56, %v60
    %v63 = vadd.f32 %v57, %v61
    %v64 = vsub.f32 0.0, %v62
    %v65 = vsub.f32 0.0, %v63
    %v68 = vcombine.high %v64, %v64
    %v69 = vcombine.high %v65, %v65
    %vm72 = vcmask 1043456
    %v73 = vsel %vm72, %v64, 0.0
    %v74 = vrot.slane %v73, 4
    %v75 = vadd.f32 %v73, %v74
    %v76 = vrot.slane %v75, 2
    %v77 = vadd.f32 %v75, %v76
    %v78 = vrot.slane %v77, 1
    %v79 = vadd.f32 %v77, %v78
    %v80 = vsel %vm72, %v68, 0.0
    %v81 = vrot.slane %v80, 4
    %v82 = vadd.f32 %v80, %v81
    %v83 = vrot.slane %v82, 2
    %v84 = vadd.f32 %v82, %v83
    %v85 = vrot.slane %v84, 1
    %v86 = vadd.f32 %v84, %v85
    %v87 = vsel %vm72, %v65, 0.0
    %v88 = vrot.slane %v87, 4
    %v89 = vadd.f32 %v87, %v88
    %v90 = vrot.slane %v89, 2
    %v91 = vadd.f32 %v89, %v90
    %v92 = vrot.slane %v91, 1
    %v93 = vadd.f32 %v91, %v92
    %v94 = vsel %vm72, %v69, 0.0
    %v95 = vrot.slane %v94, 4
    %v96 = vadd.f32 %v94, %v95
    %v97 = vrot.slane %v96, 2
    %v98 = vadd.f32 %v96, %v97
    %v99 = vrot.slane %v98, 1
    %v100 = vadd.f32 %v98, %v99
    %v101 = vlaneseq
    %v102 = vshrl.u32 %v101, 7
    %vm103 = vcmp.eq.s32.totalorder %v102, 0
    %v104 = vsel %vm103, %v79, 0.0
    %v105 = vsel %vm103, %v86, 0.0
    %v106 = vsel %vm103, %v93, 0.0
    %v107 = vsel %vm103, %v100, 0.0
    %108 = vst [vmem:[#allocation7] sm:$0xff] %v104
    %109 = vst [vmem:[#allocation7 + $0x8] sm:$0xff] %v105
    %110 = vst [vmem:[#allocation7 + $0x10] sm:$0xff] %v106
    %111 = vst [vmem:[#allocation7 + $0x18] sm:$0xff] %v107
    // Predicated region
    $region18: #{tpu_custom_call.1} parent=1 // pred_check
      _
    $region19: #{tpu_custom_call.1} parent=1 // pred_check_branch
      %113 = sbr.rel (0) target = $region21
    $region20: #{tpu_custom_call.1} parent=1 // pred_region
      %s115 = ssub.s32 512, 512
      %116 = vsyncadd [#allocation4], %s115
      %s118 = sshll.u32 [#allocation7], 4
      %s119 = int_to_ptr.vmem [resolvable:$true] %s118
      %121 = dma.vmem_to_hbm [thread:$0]  %s119, 512, %s2, [#allocation4]
    $region21: #{tpu_custom_call.1} parent=1 // pred_fallthru
      _
    // Predicated region
    $region22: #{tpu_custom_call.1} parent=1 // pred_check
      _
    $region23: #{tpu_custom_call.1} parent=1 // pred_check_branch
      %123 = sbr.rel (0) target = $region25
    $region24: #{tpu_custom_call.1} parent=1 // pred_region
      %124 = dma.done [#allocation4], 512
    $region25: #{tpu_custom_call.1} parent=1 // pred_fallthru
      _
    %125 = vsyncpa [#allocation3], 1
    %126 = vsyncpa [#allocation6], 1
    %127 = vsyncpa [#allocation4], 1

</llo_original>
